<compile_context>
chip_gen: v7x
topology: tpu7x:2x2x1
jax: 0.10.0
libtpu: 0.0.40
codegen_flags: <defaults>
</compile_context>

<pallas_src>
import math
import numpy as np
import jax
import jax.numpy as jnp
from jax.experimental import pallas as pl
from jax.experimental.pallas import tpu as pltpu


def _round_up(a, b):
    return ((a + b - 1) // b) * b


def make_fcblock_kernel(num_layers, outermost_linear, in_dims):
    """Fused MLP kernel in feature-major layout.

    refs = (x_ref, w0, b0, w1, b1, ..., w_{L-1}, b_{L-1}, out_ref)
      x_ref  : (in_features, tm)   — rows on the lane axis
      w_l    : (out_d, in_d)       — PyTorch layout, used directly (W @ h)
      b_l    : (out_d, 1)
      out_ref: (out_features, tm)
    """

    def kernel(x_ref, *refs):
        out_ref = refs[-1]
        h = x_ref[...].astype(jnp.float32)                 # (in_d, tm)
        for l in range(num_layers):
            w = refs[2 * l][...].astype(jnp.float32)       # (out_d, in_d)
            b = refs[2 * l + 1][...].astype(jnp.float32)   # (out_d, 1)
            in_d = in_dims[l]
            if in_d <= 4:
                # Degenerate contraction dim: VPU broadcast FMAs beat the MXU.
                acc = w[:, 0:1] * h[0:1, :]
                for k in range(1, in_d):
                    acc = acc + w[:, k:k + 1] * h[k:k + 1, :]
                h = acc + b
            else:
                h = jnp.dot(w, h, preferred_element_type=jnp.float32) + b
            last = (l == num_layers - 1)
            if (not last) or (not outermost_linear):
                h = jnp.maximum(h, 0.0)                    # ReLU
        out_ref[...] = h.astype(out_ref.dtype)

    return kernel


def fcblock_forward(coords, weights, biases, *, outermost_linear=False, tm=1024):
    """Pallas implementation of FCBlock.forward for nonlinearity='relu'.

    coords:   (..., in_features)
    weights:  list of (out_d, in_d) arrays  (PyTorch layout)
    biases:   list of (1, out_d) arrays
    """
    *lead, in_features = coords.shape
    M = int(np.prod(lead)) if lead else 1
    out_features = weights[-1].shape[0]
    num_layers = len(weights)

    # Feature-major (lane-dense) layout: rows live on the 128-lane axis.
    x_t = coords.reshape(M, in_features).T                 # (in_features, M)

    # Pick a large row tile, but cap it so tiny inputs don't over-pad.
    tm_eff = max(128, _round_up(min(tm, _round_up(M, 128)), 128))
    M_pad = _round_up(M, tm_eff)
    if M_pad != M:
        x_t = jnp.pad(x_t, ((0, 0), (0, M_pad - M)))

    grid = (M_pad // tm_eff,)

    in_specs = [pl.BlockSpec((in_features, tm_eff), lambda i: (0, i))]
    flat_params = []
    for w, b in zip(weights, biases):
        b_col = b.reshape(-1, 1)                           # (out_d, 1)
        in_specs.append(pl.BlockSpec(w.shape, lambda i: (0, 0)))      # full block
        in_specs.append(pl.BlockSpec(b_col.shape, lambda i: (0, 0)))  # full block
        flat_params.extend([w, b_col])

    out_spec = pl.BlockSpec((out_features, tm_eff), lambda i: (0, i))

    in_dims = [int(w.shape[1]) for w in weights]
    kernel = make_fcblock_kernel(num_layers, outermost_linear, in_dims)

    # Advisory cost estimate for XLA's scheduler (memory-bound workload).
    itemsize = jnp.dtype(coords.dtype).itemsize
    flops = 2 * M_pad * sum(int(w.shape[0]) * int(w.shape[1]) for w in weights)
    param_bytes = sum(int(w.size) * 4 for w in weights) + sum(int(b.size) * 4 for b in biases)
    bytes_accessed = M_pad * (in_features + out_features) * itemsize + param_bytes
    cost = pl.CostEstimate(flops=int(flops), transcendentals=0,
                           bytes_accessed=int(bytes_accessed))

    out_t = pl.pallas_call(
        kernel,
        out_shape=jax.ShapeDtypeStruct((out_features, M_pad), coords.dtype),
        grid=grid,
        in_specs=in_specs,
        out_specs=out_spec,
        compiler_params=pltpu.CompilerParams(dimension_semantics=("parallel",)),
        cost_estimate=cost,
    )(x_t, *flat_params)

    out = out_t[:, :M].T                                   # (M, out_features)
    return out.reshape(*lead, out_features)


def init_fcblock_params(key, in_features, out_features, num_hidden_layers,
                        hidden_features):
    """Deterministic init matching FCBlock(nonlinearity='relu'):
    weights ~ kaiming_normal(fan_in, relu) -> std = sqrt(2 / fan_in);
    biases follow nn.Linear default uniform(-1/sqrt(fan_in), 1/sqrt(fan_in))."""
    dims = ([in_features] + [hidden_features] * (num_hidden_layers + 1)
            + [out_features])
    weights, biases = [], []
    for l in range(len(dims) - 1):
        fan_in, fan_out = dims[l], dims[l + 1]
        key, kw, kb = jax.random.split(key, 3)
        std = math.sqrt(2.0 / fan_in)
        w = std * jax.random.normal(kw, (fan_out, fan_in), dtype=jnp.float32)
        bound = 1.0 / math.sqrt(fan_in)
        b = jax.random.uniform(kb, (1, fan_out), dtype=jnp.float32,
                               minval=-bound, maxval=bound)
        weights.append(w)
        biases.append(b)
    return weights, biases


def fcblock_reference(coords, weights, biases, *, outermost_linear=False):
    """Plain-JAX reference (mirrors the PyTorch forward)."""
    h = coords
    num_layers = len(weights)
    for l, (w, b) in enumerate(zip(weights, biases)):
        h = jnp.matmul(h, w.T) + b  # BatchLinear: x @ W.T + bias
        last = (l == num_layers - 1)
        if (not last) or (not outermost_linear):
            h = jax.nn.relu(h)
    return h


if __name__ == "__main__":
    key = jax.random.PRNGKey(0)

    # Small shapes consistent with FCBlock usage: coords (batch, seq, in_features)
    batch, seq = 2, 64
    in_features, hidden_features, out_features = 2, 32, 3
    num_hidden_layers = 2
    outermost_linear = False  # FCBlock default

    key, kc = jax.random.split(key)
    coords = jax.random.normal(kc, (batch, seq, in_features), dtype=jnp.float32)

    weights, biases = init_fcblock_params(
        key, in_features, out_features, num_hidden_layers, hidden_features)

    out = fcblock_forward(coords, weights, biases,
                          outermost_linear=outermost_linear)
    out = jax.block_until_ready(out)

    ref = fcblock_reference(coords, weights, biases,
                            outermost_linear=outermost_linear)
    np.testing.assert_allclose(np.asarray(out), np.asarray(ref),
                               rtol=1e-5, atol=1e-5)

    # Also exercise a case where M is not a multiple of the tile (padding path)
    key, kc2 = jax.random.split(key)
    coords2 = jax.random.normal(kc2, (3, 37, in_features), dtype=jnp.float32)
    out2 = jax.block_until_ready(
        fcblock_forward(coords2, weights, biases,
                        outermost_linear=outermost_linear))
    ref2 = fcblock_reference(coords2, weights, biases,
                             outermost_linear=outermost_linear)
    np.testing.assert_allclose(np.asarray(out2), np.asarray(ref2),
                               rtol=1e-5, atol=1e-5)

    print("KERNEL_OK")
</pallas_src>

<mosaic_0001>
module attributes {stable_mosaic.version = 11 : i64} {
  func.func @kernel(%arg0: i32, %arg1: memref<2x128xf32, #tpu.memory_space<vmem>>, %arg2: memref<32x2xf32, #tpu.memory_space<vmem>>, %arg3: memref<32x1xf32, #tpu.memory_space<vmem>>, %arg4: memref<32x32xf32, #tpu.memory_space<vmem>>, %arg5: memref<32x1xf32, #tpu.memory_space<vmem>>, %arg6: memref<32x32xf32, #tpu.memory_space<vmem>>, %arg7: memref<32x1xf32, #tpu.memory_space<vmem>>, %arg8: memref<3x32xf32, #tpu.memory_space<vmem>>, %arg9: memref<3x1xf32, #tpu.memory_space<vmem>>, %arg10: memref<3x128xf32, #tpu.memory_space<vmem>>) attributes {dimension_semantics = [#tpu.dimension_semantics<parallel>], iteration_bounds = array<i64: 1>, scalar_prefetch = 0 : i64, scratch_operands = 0 : i64, tpu.core_type = #tpu.core_type<tc>, window_params = [{transform_indices = @transform_0, window_bounds = array<i64: 2, 128>}, {pipeline_mode = #tpu.pipeline_mode<synchronous>, transform_indices = @transform_1, window_bounds = array<i64: 32, 2>}, {pipeline_mode = #tpu.pipeline_mode<synchronous>, transform_indices = @transform_2, window_bounds = array<i64: 32, 1>}, {pipeline_mode = #tpu.pipeline_mode<synchronous>, transform_indices = @transform_3, window_bounds = array<i64: 32, 32>}, {pipeline_mode = #tpu.pipeline_mode<synchronous>, transform_indices = @transform_4, window_bounds = array<i64: 32, 1>}, {pipeline_mode = #tpu.pipeline_mode<synchronous>, transform_indices = @transform_5, window_bounds = array<i64: 32, 32>}, {pipeline_mode = #tpu.pipeline_mode<synchronous>, transform_indices = @transform_6, window_bounds = array<i64: 32, 1>}, {pipeline_mode = #tpu.pipeline_mode<synchronous>, transform_indices = @transform_7, window_bounds = array<i64: 3, 32>}, {pipeline_mode = #tpu.pipeline_mode<synchronous>, transform_indices = @transform_8, window_bounds = array<i64: 3, 1>}, {transform_indices = @transform_9, window_bounds = array<i64: 3, 128>}]} {
    %c0 = arith.constant 0 : index
    %c0_0 = arith.constant 0 : index
    %0 = vector.load %arg1[%c0, %c0_0] : memref<2x128xf32, #tpu.memory_space<vmem>>, vector<2x128xf32>
    %c0_1 = arith.constant 0 : index
    %c0_2 = arith.constant 0 : index
    %1 = vector.load %arg2[%c0_1, %c0_2] : memref<32x2xf32, #tpu.memory_space<vmem>>, vector<32x2xf32>
    %c0_3 = arith.constant 0 : index
    %c0_4 = arith.constant 0 : index
    %2 = vector.load %arg3[%c0_3, %c0_4] : memref<32x1xf32, #tpu.memory_space<vmem>>, vector<32x1xf32>
    %3 = vector.extract_strided_slice %1 {offsets = [0, 0], sizes = [32, 1], strides = [1, 1]} : vector<32x2xf32> to vector<32x1xf32>
    %4 = vector.extract_strided_slice %0 {offsets = [0, 0], sizes = [1, 128], strides = [1, 1]} : vector<2x128xf32> to vector<1x128xf32>
    %5 = vector.broadcast %3 : vector<32x1xf32> to vector<32x128xf32>
    %6 = vector.broadcast %4 : vector<1x128xf32> to vector<32x128xf32>
    %7 = arith.mulf %5, %6 : vector<32x128xf32>
    %8 = vector.extract_strided_slice %1 {offsets = [0, 1], sizes = [32, 1], strides = [1, 1]} : vector<32x2xf32> to vector<32x1xf32>
    %9 = vector.extract_strided_slice %0 {offsets = [1, 0], sizes = [1, 128], strides = [1, 1]} : vector<2x128xf32> to vector<1x128xf32>
    %10 = vector.broadcast %8 : vector<32x1xf32> to vector<32x128xf32>
    %11 = vector.broadcast %9 : vector<1x128xf32> to vector<32x128xf32>
    %12 = arith.mulf %10, %11 : vector<32x128xf32>
    %13 = arith.addf %7, %12 : vector<32x128xf32>
    %14 = vector.broadcast %2 : vector<32x1xf32> to vector<32x128xf32>
    %15 = arith.addf %13, %14 : vector<32x128xf32>
    %cst = arith.constant 0.000000e+00 : f32
    %16 = vector.broadcast %cst : f32 to vector<32x128xf32>
    %17 = arith.maximumf %15, %16 : vector<32x128xf32>
    %c0_5 = arith.constant 0 : index
    %c0_6 = arith.constant 0 : index
    %18 = vector.load %arg4[%c0_5, %c0_6] : memref<32x32xf32, #tpu.memory_space<vmem>>, vector<32x32xf32>
    %c0_7 = arith.constant 0 : index
    %c0_8 = arith.constant 0 : index
    %19 = vector.load %arg5[%c0_7, %c0_8] : memref<32x1xf32, #tpu.memory_space<vmem>>, vector<32x1xf32>
    %cst_9 = arith.constant dense<0.000000e+00> : vector<32x128xf32>
    %20 = tpu.matmul %18, %17, %cst_9 {dimension_numbers = #tpu.dot_dimension_numbers<[1], [0], [0], [1], [0, 0, 1, 1], [], []>} : vector<32x32xf32>, vector<32x128xf32>, vector<32x128xf32> -> vector<32x128xf32>
    %21 = vector.broadcast %19 : vector<32x1xf32> to vector<32x128xf32>
    %22 = arith.addf %20, %21 : vector<32x128xf32>
    %cst_10 = arith.constant 0.000000e+00 : f32
    %23 = vector.broadcast %cst_10 : f32 to vector<32x128xf32>
    %24 = arith.maximumf %22, %23 : vector<32x128xf32>
    %c0_11 = arith.constant 0 : index
    %c0_12 = arith.constant 0 : index
    %25 = vector.load %arg6[%c0_11, %c0_12] : memref<32x32xf32, #tpu.memory_space<vmem>>, vector<32x32xf32>
    %c0_13 = arith.constant 0 : index
    %c0_14 = arith.constant 0 : index
    %26 = vector.load %arg7[%c0_13, %c0_14] : memref<32x1xf32, #tpu.memory_space<vmem>>, vector<32x1xf32>
    %cst_15 = arith.constant dense<0.000000e+00> : vector<32x128xf32>
    %27 = tpu.matmul %25, %24, %cst_15 {dimension_numbers = #tpu.dot_dimension_numbers<[1], [0], [0], [1], [0, 0, 1, 1], [], []>} : vector<32x32xf32>, vector<32x128xf32>, vector<32x128xf32> -> vector<32x128xf32>
    %28 = vector.broadcast %26 : vector<32x1xf32> to vector<32x128xf32>
    %29 = arith.addf %27, %28 : vector<32x128xf32>
    %cst_16 = arith.constant 0.000000e+00 : f32
    %30 = vector.broadcast %cst_16 : f32 to vector<32x128xf32>
    %31 = arith.maximumf %29, %30 : vector<32x128xf32>
    %c0_17 = arith.constant 0 : index
    %c0_18 = arith.constant 0 : index
    %32 = vector.load %arg8[%c0_17, %c0_18] : memref<3x32xf32, #tpu.memory_space<vmem>>, vector<3x32xf32>
    %c0_19 = arith.constant 0 : index
    %c0_20 = arith.constant 0 : index
    %33 = vector.load %arg9[%c0_19, %c0_20] : memref<3x1xf32, #tpu.memory_space<vmem>>, vector<3x1xf32>
    %cst_21 = arith.constant dense<0.000000e+00> : vector<3x128xf32>
    %34 = tpu.matmul %32, %31, %cst_21 {dimension_numbers = #tpu.dot_dimension_numbers<[1], [0], [0], [1], [0, 0, 1, 1], [], []>} : vector<3x32xf32>, vector<32x128xf32>, vector<3x128xf32> -> vector<3x128xf32>
    %35 = vector.broadcast %33 : vector<3x1xf32> to vector<3x128xf32>
    %36 = arith.addf %34, %35 : vector<3x128xf32>
    %cst_22 = arith.constant 0.000000e+00 : f32
    %37 = vector.broadcast %cst_22 : f32 to vector<3x128xf32>
    %38 = arith.maximumf %36, %37 : vector<3x128xf32>
    %c0_23 = arith.constant 0 : index
    %c0_24 = arith.constant 0 : index
    %39 = vector.load %arg10[%c0_23, %c0_24] : memref<3x128xf32, #tpu.memory_space<vmem>>, vector<3x128xf32>
    tpu.vector_store %arg10[%c0_23, %c0_24], %38 {strides = array<i32>} : memref<3x128xf32, #tpu.memory_space<vmem>>, vector<3x128xf32>,
    return
  }
  func.func @transform_0(%arg0: i32) -> (i32, i32) {
    %c0_i32 = arith.constant 0 : i32
    %c0_i32_0 = arith.constant 0 : i32
    return %c0_i32, %arg0 : i32, i32
  }
  func.func @transform_1(%arg0: i32) -> (i32, i32) {
    %c0_i32 = arith.constant 0 : i32
    %c0_i32_0 = arith.constant 0 : i32
    %c0_i32_1 = arith.constant 0 : i32
    return %c0_i32, %c0_i32_0 : i32, i32
  }
  func.func @transform_2(%arg0: i32) -> (i32, i32) {
    %c0_i32 = arith.constant 0 : i32
    %c0_i32_0 = arith.constant 0 : i32
    %c0_i32_1 = arith.constant 0 : i32
    return %c0_i32, %c0_i32_0 : i32, i32
  }
  func.func @transform_3(%arg0: i32) -> (i32, i32) {
    %c0_i32 = arith.constant 0 : i32
    %c0_i32_0 = arith.constant 0 : i32
    %c0_i32_1 = arith.constant 0 : i32
    return %c0_i32, %c0_i32_0 : i32, i32
  }
  func.func @transform_4(%arg0: i32) -> (i32, i32) {
    %c0_i32 = arith.constant 0 : i32
    %c0_i32_0 = arith.constant 0 : i32
    %c0_i32_1 = arith.constant 0 : i32
    return %c0_i32, %c0_i32_0 : i32, i32
  }
  func.func @transform_5(%arg0: i32) -> (i32, i32) {
    %c0_i32 = arith.constant 0 : i32
    %c0_i32_0 = arith.constant 0 : i32
    %c0_i32_1 = arith.constant 0 : i32
    return %c0_i32, %c0_i32_0 : i32, i32
  }
  func.func @transform_6(%arg0: i32) -> (i32, i32) {
    %c0_i32 = arith.constant 0 : i32
    %c0_i32_0 = arith.constant 0 : i32
    %c0_i32_1 = arith.constant 0 : i32
    return %c0_i32, %c0_i32_0 : i32, i32
  }
  func.func @transform_7(%arg0: i32) -> (i32, i32) {
    %c0_i32 = arith.constant 0 : i32
    %c0_i32_0 = arith.constant 0 : i32
    %c0_i32_1 = arith.constant 0 : i32
    return %c0_i32, %c0_i32_0 : i32, i32
  }
  func.func @transform_8(%arg0: i32) -> (i32, i32) {
    %c0_i32 = arith.constant 0 : i32
    %c0_i32_0 = arith.constant 0 : i32
    %c0_i32_1 = arith.constant 0 : i32
    return %c0_i32, %c0_i32_0 : i32, i32
  }
  func.func @transform_9(%arg0: i32) -> (i32, i32) {
    %c0_i32 = arith.constant 0 : i32
    %c0_i32_0 = arith.constant 0 : i32
    return %c0_i32, %arg0 : i32, i32
  }
}

</mosaic_0001>

<llo_original>
// kernel: tpu_custom_call.1
$region0: #{tpu_custom_call.1}
  #allocation0 [shape = 'u32[]', space=smem, size = 0x4, offset = 0x4, fixed_abs, tag = 'smem constant byte address 0x4 - core index']
  #allocation1 [shape = 'u32[144,128]{1,0:T(1,128)}', space=vmem, size = 0x12000, scoped, tag = 'internal scratch']
  %s0 = inlined_call_operand.vmem [shape: f32[2,128], index: 0, kind: input, shape index: {}]
  %s1 = inlined_call_operand.vmem [shape: f32[32,2], index: 1, kind: input, shape index: {}]
  %s2 = inlined_call_operand.vmem [shape: f32[32,1], index: 2, kind: input, shape index: {}]
  %s3 = inlined_call_operand.vmem [shape: f32[32,32], index: 3, kind: input, shape index: {}]
  %s4 = inlined_call_operand.vmem [shape: f32[32,1], index: 4, kind: input, shape index: {}]
  %s5 = inlined_call_operand.vmem [shape: f32[32,32], index: 5, kind: input, shape index: {}]
  %s6 = inlined_call_operand.vmem [shape: f32[32,1], index: 6, kind: input, shape index: {}]
  %s7 = inlined_call_operand.vmem [shape: f32[3,32], index: 7, kind: input, shape index: {}]
  %s8 = inlined_call_operand.vmem [shape: f32[3,1], index: 8, kind: input, shape index: {}]
  %s9 = inlined_call_operand.hbm [shape: f32[3,128], index: 9, kind: output, shape index: {}]
  %s10 = sld [smem:[#allocation0]]
  $region46: #{tpu_custom_call.1} parent=0
    _
  %s12 = ssub.s32 1, %s10
  %s13 = scalar_select 0, %s12, %s10
  $region1: #{tpu_custom_call.1} parent=0
    #allocation2 [shape = 'u8[2048]{0}', space=vmem, size = 0x800, scoped, tag = 'output window, operand 0, single buffered']
    #allocation3 [shape = 's32[1]{0}', space=sflag, size = 0x4, scoped, tag = 'scoped memory for tpu_custom_call.1']
    %14 = vsyncpa [#allocation3], 0
    // Predicated region
    $region2: #{tpu_custom_call.1} parent=1 // pred_check
      _
    $region3: #{tpu_custom_call.1} parent=1 // pred_check_branch
      %16 = sbr.rel (0) target = $region5
    $region4: #{tpu_custom_call.1} parent=1 // pred_region
      _
    $region5: #{tpu_custom_call.1} parent=1 // pred_fallthru
      _
    // Predicated region
    $region6: #{tpu_custom_call.1} parent=1 // pred_check
      _
    $region7: #{tpu_custom_call.1} parent=1 // pred_check_branch
      %18 = sbr.rel (0) target = $region9
    $region8: #{tpu_custom_call.1} parent=1 // pred_region
      _
    $region9: #{tpu_custom_call.1} parent=1 // pred_fallthru
      _
    // Predicated region
    $region10: #{tpu_custom_call.1} parent=1 // pred_check
      _
    $region11: #{tpu_custom_call.1} parent=1 // pred_check_branch
      %20 = sbr.rel (0) target = $region13
    $region12: #{tpu_custom_call.1} parent=1 // pred_region
      _
    $region13: #{tpu_custom_call.1} parent=1 // pred_fallthru
      _
    // Predicated region
    $region14: #{tpu_custom_call.1} parent=1 // pred_check
      _
    $region15: #{tpu_custom_call.1} parent=1 // pred_check_branch
      %22 = sbr.rel (0) target = $region17
    $region16: #{tpu_custom_call.1} parent=1 // pred_region
      _
    $region17: #{tpu_custom_call.1} parent=1 // pred_fallthru
      _
    // Predicated region
    $region18: #{tpu_custom_call.1} parent=1 // pred_check
      _
    $region19: #{tpu_custom_call.1} parent=1 // pred_check_branch
      %24 = sbr.rel (0) target = $region21
    $region20: #{tpu_custom_call.1} parent=1 // pred_region
      _
    $region21: #{tpu_custom_call.1} parent=1 // pred_fallthru
      _
    // Predicated region
    $region22: #{tpu_custom_call.1} parent=1 // pred_check
      _
    $region23: #{tpu_custom_call.1} parent=1 // pred_check_branch
      %26 = sbr.rel (0) target = $region25
    $region24: #{tpu_custom_call.1} parent=1 // pred_region
      _
    $region25: #{tpu_custom_call.1} parent=1 // pred_fallthru
      _
    // Predicated region
    $region26: #{tpu_custom_call.1} parent=1 // pred_check
      _
    $region27: #{tpu_custom_call.1} parent=1 // pred_check_branch
      %28 = sbr.rel (0) target = $region29
    $region28: #{tpu_custom_call.1} parent=1 // pred_region
      _
    $region29: #{tpu_custom_call.1} parent=1 // pred_fallthru
      _
    // Predicated region
    $region30: #{tpu_custom_call.1} parent=1 // pred_check
      _
    $region31: #{tpu_custom_call.1} parent=1 // pred_check_branch
      %30 = sbr.rel (0) target = $region33
    $region32: #{tpu_custom_call.1} parent=1 // pred_region
      _
    $region33: #{tpu_custom_call.1} parent=1 // pred_fallthru
      _
    // Predicated region
    $region34: #{tpu_custom_call.1} parent=1 // pred_check
      _
    $region35: #{tpu_custom_call.1} parent=1 // pred_check_branch
      %32 = sbr.rel (0) target = $region37
    $region36: #{tpu_custom_call.1} parent=1 // pred_region
      _
    $region37: #{tpu_custom_call.1} parent=1 // pred_fallthru
      _
    %v33 = vld [vmem:[%s0] sm:$0x3]
    %v34 = vld [vmem:[%s1] sm:$0xff]
    %v35 = vld [vmem:[%s1 + $0x8] sm:$0xff]
    %v36 = vld [vmem:[%s1 + $0x10] sm:$0xff]
    %v37 = vld [vmem:[%s1 + $0x18] sm:$0xff]
    %v38 = vld [vmem:[%s2] sm:$0xff]
    %v39 = vld [vmem:[%s2 + $0x8] sm:$0xff]
    %v40 = vld [vmem:[%s2 + $0x10] sm:$0xff]
    %v41 = vld [vmem:[%s2 + $0x18] sm:$0xff]
    %43 = vset.pattern.permute.xlu0 0
    %44 = vperm.xlu0 %43, %v34
    %v45 = vpop.permute.xlu0 %44
    %48 = vset.pattern.permute.xlu0 0
    %49 = vperm.xlu0 %48, %v35
    %v50 = vpop.permute.xlu0 %49
    %53 = vset.pattern.permute.xlu0 0
    %54 = vperm.xlu0 %53, %v36
    %v55 = vpop.permute.xlu0 %54
    %58 = vset.pattern.permute.xlu0 0
    %59 = vperm.xlu0 %58, %v37
    %v60 = vpop.permute.xlu0 %59
    %v62 = vlaneseq
    %v63 = vshrl.u32 %v62, 7
    %v64 = vsub.s32 0, %v63
    %v65 = vrot.slane %v33, %v64
    %v66 = vmul.f32 %v45, %v65
    %v67 = vmul.f32 %v50, %v65
    %v68 = vmul.f32 %v55, %v65
    %v69 = vmul.f32 %v60, %v65
    %70 = vset.pattern.permute.xlu0 1
    %71 = vperm.xlu0 %70, %v34
    %v72 = vpop.permute.xlu0 %71
    %74 = vset.pattern.permute.xlu0 1
    %75 = vperm.xlu0 %74, %v35
    %v76 = vpop.permute.xlu0 %75
    %78 = vset.pattern.permute.xlu0 1
    %79 = vperm.xlu0 %78, %v36
    %v80 = vpop.permute.xlu0 %79
    %82 = vset.pattern.permute.xlu0 1
    %83 = vperm.xlu0 %82, %v37
    %v84 = vpop.permute.xlu0 %83
    %v86 = vlaneseq
    %v87 = vshrl.u32 %v86, 7
    %v88 = vsub.s32 1, %v87
    %v89 = vrot.slane %v33, %v88
    %v90 = vmul.f32 %v72, %v89
    %v91 = vmul.f32 %v76, %v89
    %v92 = vmul.f32 %v80, %v89
    %v93 = vmul.f32 %v84, %v89
    %v94 = vadd.f32 %v66, %v90
    %v95 = vadd.f32 %v67, %v91
    %v96 = vadd.f32 %v68, %v92
    %v97 = vadd.f32 %v69, %v93
    %99 = vset.pattern.permute.xlu0 0
    %100 = vperm.xlu0 %99, %v38
    %v101 = vpop.permute.xlu0 %100
    %104 = vset.pattern.permute.xlu0 0
    %105 = vperm.xlu0 %104, %v39
    %v106 = vpop.permute.xlu0 %105
    %109 = vset.pattern.permute.xlu0 0
    %110 = vperm.xlu0 %109, %v40
    %v111 = vpop.permute.xlu0 %110
    %114 = vset.pattern.permute.xlu0 0
    %115 = vperm.xlu0 %114, %v41
    %v116 = vpop.permute.xlu0 %115
    %v118 = vadd.f32 %v94, %v101
    %v119 = vadd.f32 %v95, %v106
    %v120 = vadd.f32 %v96, %v111
    %v121 = vadd.f32 %v97, %v116
    %v122 = vmax.f32 %v118, 0.0
    %v123 = vmax.f32 %v119, 0.0
    %v124 = vmax.f32 %v120, 0.0
    %v125 = vmax.f32 %v121, 0.0
    %v126 = vld [vmem:[%s3] sm:$0xff]
    %v127 = vld [vmem:[%s3 + $0x8] sm:$0xff]
    %v128 = vld [vmem:[%s3 + $0x10] sm:$0xff]
    %v129 = vld [vmem:[%s3 + $0x18] sm:$0xff]
    %v130 = vld [vmem:[%s4] sm:$0xff]
    %v131 = vld [vmem:[%s4 + $0x8] sm:$0xff]
    %v132 = vld [vmem:[%s4 + $0x10] sm:$0xff]
    %v133 = vld [vmem:[%s4 + $0x18] sm:$0xff]
    %135 = vset.pattern.permute.xlu0 0
    %136 = vperm.xlu0 %135, %v130
    %v137 = vpop.permute.xlu0 %136
    %140 = vset.pattern.permute.xlu0 0
    %141 = vperm.xlu0 %140, %v131
    %v142 = vpop.permute.xlu0 %141
    %145 = vset.pattern.permute.xlu0 0
    %146 = vperm.xlu0 %145, %v132
    %v147 = vpop.permute.xlu0 %146
    %150 = vset.pattern.permute.xlu0 0
    %151 = vperm.xlu0 %150, %v133
    %v152 = vpop.permute.xlu0 %151
    %vm154 = vcmask 261120
    %v156 = vsel %vm154, %v126, 0
    %v159 = vsel %vm154, %v127, 0
    %v162 = vsel %vm154, %v128, 0
    %v165 = vsel %vm154, %v129, 0
    %167 = vmatprep.subr.mxu0 0.0
    %168 = vmatpush1.msra.mxu0 %v122
    %169 = vmatprep.subr.mxu0 0.0
    %170 = vmatpush1.msra.mxu0 %v123
    %171 = vmatprep.subr.mxu0 0.0
    %172 = vmatpush1.msra.mxu0 %v124
    %173 = vmatprep.subr.mxu0 0.0
    %174 = vmatpush1.msra.mxu0 %v125
    %175 = vmatprep.subr.mxu0 0.0
    %176 = vmatpush1.msra.mxu0 0.0
    %177 = vmatprep.subr.mxu0 0.0
    %178 = vmatpush1.msra.mxu0 0.0
    %179 = vmatprep.subr.mxu0 0.0
    %180 = vmatpush1.msra.mxu0 0.0
    %181 = vmatprep.subr.mxu0 0.0
    %182 = vmatpush1.msra.mxu0 0.0
    %183 = vmatprep.subr.mxu0 0.0
    %184 = vmatpush1.msra.mxu0 0.0
    %185 = vmatprep.subr.mxu0 0.0
    %186 = vmatpush1.msra.mxu0 0.0
    %187 = vmatprep.subr.mxu0 0.0
    %188 = vmatpush1.msra.mxu0 0.0
    %189 = vmatprep.subr.mxu0 0.0
    %190 = vmatpush1.msra.mxu0 0.0
    %191 = vmatprep.subr.mxu0 0.0
    %192 = vmatpush1.msra.mxu0 0.0
    %193 = vmatprep.subr.mxu0 0.0
    %194 = vmatpush1.msra.mxu0 0.0
    %195 = vmatprep.subr.mxu0 0.0
    %196 = vmatpush1.msra.mxu0 0.0
    %197 = vmatprep.subr.mxu0 0.0
    %198 = vmatpush1.msra.mxu0 0.0
    %199 = vmatprep.subr.mxu0 0.0
    %200 = vmatpush1.msra.mxu0 0.0
    %201 = vmatprep.subr.mxu0 0.0
    %202 = vmatpush1.msra.mxu0 0.0
    %203 = vmatprep.subr.mxu0 0.0
    %204 = vmatpush1.msra.mxu0 0.0
    %205 = vmatprep.subr.mxu0 0.0
    %206 = vmatpush1.msra.mxu0 0.0
    %207 = vmatprep.subr.mxu0 0.0
    %208 = vmatpush1.msra.mxu0 0.0
    %209 = vmatprep.subr.mxu0 0.0
    %210 = vmatpush1.msra.mxu0 0.0
    %211 = vmatprep.subr.mxu0 0.0
    %212 = vmatpush1.msra.mxu0 0.0
    %213 = vmatprep.subr.mxu0 0.0
    %214 = vmatpush1.msra.mxu0 0.0
    %215 = vmatprep.subr.mxu0 0.0
    %216 = vmatpush1.msra.mxu0 0.0
    %217 = vmatprep.subr.mxu0 0.0
    %218 = vmatpush1.msra.mxu0 0.0
    %219 = vmatprep.subr.mxu0 0.0
    %220 = vmatpush1.msra.mxu0 0.0
    %221 = vmatprep.subr.mxu0 0.0
    %222 = vmatpush1.msra.mxu0 0.0
    %223 = vmatprep.subr.mxu0 0.0
    %224 = vmatpush1.msra.mxu0 0.0
    %225 = vmatprep.subr.mxu0 0.0
    %226 = vmatpush1.msra.mxu0 0.0
    %227 = vmatprep.subr.mxu0 0.0
    %228 = vmatpush1.msra.mxu0 0.0
    %229 = vmatprep.subr.mxu0 0.0
    %230 = vmatpush1.msra.mxu0 0.0
    %231 = vmatprep.mubr.f32.mxu0 0.0
    %232 = vmatmul.mubr.f32.gmra.mrb[0].mxu0 %v156
    %v233 = vpop.f32.mrb[0].mxu0
    %v234 = vadd.f32 %v137, %v233
    %v235 = vpop.f32.mrb[0].mxu0
    %236 = vmatprep.mubr.f32.mxu0 0.0
    %237 = vmatmul.mubr.f32.gmra.mrb[0].mxu0 %v159
    %v238 = vpop.f32.mrb[0].mxu0
    %v239 = vadd.f32 %v142, %v238
    %v240 = vpop.f32.mrb[0].mxu0
    %241 = vmatprep.mubr.f32.mxu0 0.0
    %242 = vmatmul.mubr.f32.gmra.mrb[0].mxu0 %v162
    %v243 = vpop.f32.mrb[0].mxu0
    %v244 = vadd.f32 %v147, %v243
    %v245 = vpop.f32.mrb[0].mxu0
    %246 = vmatprep.mubr.f32.mxu0 0.0
    %247 = vmatmul.mubr.f32.gmra.mrb[0].mxu0 %v165
    %v248 = vpop.f32.mrb[0].mxu0
    %v249 = vadd.f32 %v152, %v248
    %v250 = vpop.f32.mrb[0].mxu0
    %251 = vdwg.mxu0
    %v252 = vmax.f32 %v234, 0.0
    %v253 = vmax.f32 %v239, 0.0
    %v254 = vmax.f32 %v244, 0.0
    %v255 = vmax.f32 %v249, 0.0
    %v256 = vld [vmem:[%s5] sm:$0xff]
    %v257 = vld [vmem:[%s5 + $0x8] sm:$0xff]
    %v258 = vld [vmem:[%s5 + $0x10] sm:$0xff]
    %v259 = vld [vmem:[%s5 + $0x18] sm:$0xff]
    %v260 = vld [vmem:[%s6] sm:$0xff]
    %v261 = vld [vmem:[%s6 + $0x8] sm:$0xff]
    %v262 = vld [vmem:[%s6 + $0x10] sm:$0xff]
    %v263 = vld [vmem:[%s6 + $0x18] sm:$0xff]
    %265 = vset.pattern.permute.xlu0 0
    %266 = vperm.xlu0 %265, %v260
    %v267 = vpop.permute.xlu0 %266
    %270 = vset.pattern.permute.xlu0 0
    %271 = vperm.xlu0 %270, %v261
    %v272 = vpop.permute.xlu0 %271
    %275 = vset.pattern.permute.xlu0 0
    %276 = vperm.xlu0 %275, %v262
    %v277 = vpop.permute.xlu0 %276
    %280 = vset.pattern.permute.xlu0 0
    %281 = vperm.xlu0 %280, %v263
    %v282 = vpop.permute.xlu0 %281
    %v285 = vsel %vm154, %v256, 0
    %v288 = vsel %vm154, %v257, 0
    %v291 = vsel %vm154, %v258, 0
    %v294 = vsel %vm154, %v259, 0
    %296 = vmatprep.subr.mxu0 0.0
    %297 = vmatpush1.msra.mxu0 %v252
    %298 = vmatprep.subr.mxu0 0.0
    %299 = vmatpush1.msra.mxu0 %v253
    %300 = vmatprep.subr.mxu0 0.0
    %301 = vmatpush1.msra.mxu0 %v254
    %302 = vmatprep.subr.mxu0 0.0
    %303 = vmatpush1.msra.mxu0 %v255
    %304 = vmatprep.subr.mxu0 0.0
    %305 = vmatpush1.msra.mxu0 0.0
    %306 = vmatprep.subr.mxu0 0.0
    %307 = vmatpush1.msra.mxu0 0.0
    %308 = vmatprep.subr.mxu0 0.0
    %309 = vmatpush1.msra.mxu0 0.0
    %310 = vmatprep.subr.mxu0 0.0
    %311 = vmatpush1.msra.mxu0 0.0
    %312 = vmatprep.subr.mxu0 0.0
    %313 = vmatpush1.msra.mxu0 0.0
    %314 = vmatprep.subr.mxu0 0.0
    %315 = vmatpush1.msra.mxu0 0.0
    %316 = vmatprep.subr.mxu0 0.0
    %317 = vmatpush1.msra.mxu0 0.0
    %318 = vmatprep.subr.mxu0 0.0
    %319 = vmatpush1.msra.mxu0 0.0
    %320 = vmatprep.subr.mxu0 0.0
    %321 = vmatpush1.msra.mxu0 0.0
    %322 = vmatprep.subr.mxu0 0.0
    %323 = vmatpush1.msra.mxu0 0.0
    %324 = vmatprep.subr.mxu0 0.0
    %325 = vmatpush1.msra.mxu0 0.0
    %326 = vmatprep.subr.mxu0 0.0
    %327 = vmatpush1.msra.mxu0 0.0
    %328 = vmatprep.subr.mxu0 0.0
    %329 = vmatpush1.msra.mxu0 0.0
    %330 = vmatprep.subr.mxu0 0.0
    %331 = vmatpush1.msra.mxu0 0.0
    %332 = vmatprep.subr.mxu0 0.0
    %333 = vmatpush1.msra.mxu0 0.0
    %334 = vmatprep.subr.mxu0 0.0
    %335 = vmatpush1.msra.mxu0 0.0
    %336 = vmatprep.subr.mxu0 0.0
    %337 = vmatpush1.msra.mxu0 0.0
    %338 = vmatprep.subr.mxu0 0.0
    %339 = vmatpush1.msra.mxu0 0.0
    %340 = vmatprep.subr.mxu0 0.0
    %341 = vmatpush1.msra.mxu0 0.0
    %342 = vmatprep.subr.mxu0 0.0
    %343 = vmatpush1.msra.mxu0 0.0
    %344 = vmatprep.subr.mxu0 0.0
    %345 = vmatpush1.msra.mxu0 0.0
    %346 = vmatprep.subr.mxu0 0.0
    %347 = vmatpush1.msra.mxu0 0.0
    %348 = vmatprep.subr.mxu0 0.0
    %349 = vmatpush1.msra.mxu0 0.0
    %350 = vmatprep.subr.mxu0 0.0
    %351 = vmatpush1.msra.mxu0 0.0
    %352 = vmatprep.subr.mxu0 0.0
    %353 = vmatpush1.msra.mxu0 0.0
    %354 = vmatprep.subr.mxu0 0.0
    %355 = vmatpush1.msra.mxu0 0.0
    %356 = vmatprep.subr.mxu0 0.0
    %357 = vmatpush1.msra.mxu0 0.0
    %358 = vmatprep.subr.mxu0 0.0
    %359 = vmatpush1.msra.mxu0 0.0
    %360 = vmatprep.mubr.f32.mxu0 0.0
    %361 = vmatmul.mubr.f32.gmra.mrb[0].mxu0 %v285
    %v362 = vpop.f32.mrb[0].mxu0
    %v363 = vadd.f32 %v267, %v362
    %v364 = vpop.f32.mrb[0].mxu0
    %365 = vmatprep.mubr.f32.mxu0 0.0
    %366 = vmatmul.mubr.f32.gmra.mrb[0].mxu0 %v288
    %v367 = vpop.f32.mrb[0].mxu0
    %v368 = vadd.f32 %v272, %v367
    %v369 = vpop.f32.mrb[0].mxu0
    %370 = vmatprep.mubr.f32.mxu0 0.0
    %371 = vmatmul.mubr.f32.gmra.mrb[0].mxu0 %v291
    %v372 = vpop.f32.mrb[0].mxu0
    %v373 = vadd.f32 %v277, %v372
    %v374 = vpop.f32.mrb[0].mxu0
    %375 = vmatprep.mubr.f32.mxu0 0.0
    %376 = vmatmul.mubr.f32.gmra.mrb[0].mxu0 %v294
    %v377 = vpop.f32.mrb[0].mxu0
    %v378 = vadd.f32 %v282, %v377
    %v379 = vpop.f32.mrb[0].mxu0
    %380 = vdwg.mxu0
    %v381 = vmax.f32 %v363, 0.0
    %v382 = vmax.f32 %v368, 0.0
    %v383 = vmax.f32 %v373, 0.0
    %v384 = vmax.f32 %v378, 0.0
    %v385 = vld [vmem:[%s7] sm:$0x7]
    %v386 = vld [vmem:[%s8] sm:$0x7]
    %388 = vset.pattern.permute.xlu0 0
    %389 = vperm.xlu0 %388, %v386
    %v390 = vpop.permute.xlu0 %389
    %v393 = vsel %vm154, %v385, 0
    %395 = vmatprep.subr.mxu0 0.0
    %396 = vmatpush1.msra.mxu0 %v381
    %397 = vmatprep.subr.mxu0 0.0
    %398 = vmatpush1.msra.mxu0 %v382
    %399 = vmatprep.subr.mxu0 0.0
    %400 = vmatpush1.msra.mxu0 %v383
    %401 = vmatprep.subr.mxu0 0.0
    %402 = vmatpush1.msra.mxu0 %v384
    %403 = vmatprep.subr.mxu0 0.0
    %404 = vmatpush1.msra.mxu0 0.0
    %405 = vmatprep.subr.mxu0 0.0
    %406 = vmatpush1.msra.mxu0 0.0
    %407 = vmatprep.subr.mxu0 0.0
    %408 = vmatpush1.msra.mxu0 0.0
    %409 = vmatprep.subr.mxu0 0.0
    %410 = vmatpush1.msra.mxu0 0.0
    %411 = vmatprep.subr.mxu0 0.0
    %412 = vmatpush1.msra.mxu0 0.0
    %413 = vmatprep.subr.mxu0 0.0
    %414 = vmatpush1.msra.mxu0 0.0
    %415 = vmatprep.subr.mxu0 0.0
    %416 = vmatpush1.msra.mxu0 0.0
    %417 = vmatprep.subr.mxu0 0.0
    %418 = vmatpush1.msra.mxu0 0.0
    %419 = vmatprep.subr.mxu0 0.0
    %420 = vmatpush1.msra.mxu0 0.0
    %421 = vmatprep.subr.mxu0 0.0
    %422 = vmatpush1.msra.mxu0 0.0
    %423 = vmatprep.subr.mxu0 0.0
    %424 = vmatpush1.msra.mxu0 0.0
    %425 = vmatprep.subr.mxu0 0.0
    %426 = vmatpush1.msra.mxu0 0.0
    %427 = vmatprep.subr.mxu0 0.0
    %428 = vmatpush1.msra.mxu0 0.0
    %429 = vmatprep.subr.mxu0 0.0
    %430 = vmatpush1.msra.mxu0 0.0
    %431 = vmatprep.subr.mxu0 0.0
    %432 = vmatpush1.msra.mxu0 0.0
    %433 = vmatprep.subr.mxu0 0.0
    %434 = vmatpush1.msra.mxu0 0.0
    %435 = vmatprep.subr.mxu0 0.0
    %436 = vmatpush1.msra.mxu0 0.0
    %437 = vmatprep.subr.mxu0 0.0
    %438 = vmatpush1.msra.mxu0 0.0
    %439 = vmatprep.subr.mxu0 0.0
    %440 = vmatpush1.msra.mxu0 0.0
    %441 = vmatprep.subr.mxu0 0.0
    %442 = vmatpush1.msra.mxu0 0.0
    %443 = vmatprep.subr.mxu0 0.0
    %444 = vmatpush1.msra.mxu0 0.0
    %445 = vmatprep.subr.mxu0 0.0
    %446 = vmatpush1.msra.mxu0 0.0
    %447 = vmatprep.subr.mxu0 0.0
    %448 = vmatpush1.msra.mxu0 0.0
    %449 = vmatprep.subr.mxu0 0.0
    %450 = vmatpush1.msra.mxu0 0.0
    %451 = vmatprep.subr.mxu0 0.0
    %452 = vmatpush1.msra.mxu0 0.0
    %453 = vmatprep.subr.mxu0 0.0
    %454 = vmatpush1.msra.mxu0 0.0
    %455 = vmatprep.subr.mxu0 0.0
    %456 = vmatpush1.msra.mxu0 0.0
    %457 = vmatprep.subr.mxu0 0.0
    %458 = vmatpush1.msra.mxu0 0.0
    %459 = vmatprep.mubr.f32.mxu0 0.0
    %460 = vmatmul.mubr.f32.gmra.mrb[0].mxu0 %v393
    %v461 = vpop.f32.mrb[0].mxu0
    %v462 = vadd.f32 %v390, %v461
    %v463 = vpop.f32.mrb[0].mxu0
    %464 = vdwg.mxu0
    %v465 = vmax.f32 %v462, 0.0
    %466 = vst [vmem:[#allocation2] sm:$0x7] %v465
    // Predicated region
    $region38: #{tpu_custom_call.1} parent=1 // pred_check
      _
    $region39: #{tpu_custom_call.1} parent=1 // pred_check_branch
      %468 = sbr.rel (0) target = $region41
    $region40: #{tpu_custom_call.1} parent=1 // pred_region
      %s470 = ssub.s32 64, 64
      %471 = vsyncadd [#allocation3], %s470
      %s473 = sshll.u32 [#allocation2], 4
      %s474 = int_to_ptr.vmem [resolvable:$true] %s473
      %476 = dma.vmem_to_hbm [thread:$0]  %s474, 64, %s9, [#allocation3]
    $region41: #{tpu_custom_call.1} parent=1 // pred_fallthru
      _
    // Predicated region
    $region42: #{tpu_custom_call.1} parent=1 // pred_check
      _
    $region43: #{tpu_custom_call.1} parent=1 // pred_check_branch
      %478 = sbr.rel (0) target = $region45
    $region44: #{tpu_custom_call.1} parent=1 // pred_region
      %479 = dma.done [#allocation3], 64
    $region45: #{tpu_custom_call.1} parent=1 // pred_fallthru
      _
    %480 = vsyncpa [#allocation3], 1

</llo_original>
